<compile_context>
chip_gen: v6e
topology: v6e:2x2x1
jax: 0.10.0
libtpu: 0.0.40
codegen_flags: <defaults>
</compile_context>

<pallas_src>
import jax
import jax.numpy as jnp
from jax.experimental import pallas as pl
from jax.experimental.pallas import tpu as pltpu

_VMEM_BUDGET = 16 * 1024 * 1024   # per-step working-set target (fits v5e's 16 MiB default)
_VMEM_LIMIT = 32 * 1024 * 1024    # explicit scoped-VMEM limit; <= physical on v5e/v6e/v7x


def _round_up(n, m):
    return ((n + m - 1) // m) * m


def _resident(a):
    """Constant-index BlockSpec: array stays VMEM-resident across grid steps."""
    nd = a.ndim
    return pl.BlockSpec(a.shape, lambda i, _nd=nd: (0,) * _nd)


def _pick_block_rows(n_rows, per_row_bytes, resident_bytes, target_rows):
    """Rows per grid step:
      - big enough to amortize the ~0.35 us fixed per-step overhead,
      - small enough that streamed x (x2 buffers) + f32 h1/h2 intermediates +
        output fit the VMEM budget next to the resident weights,
      - >= 2 grid steps for large inputs so ("parallel",) can use both v7x TCs.
    """
    budget = max(_VMEM_BUDGET - 2 * resident_bytes, 2 * 1024 * 1024)
    tb = min(_round_up(target_rows, 8), _round_up(n_rows, 8))
    while tb > 128 and tb * per_row_bytes > budget:
        tb = _round_up(tb // 2, 8)
    if n_rows >= 256 and pl.cdiv(n_rows, tb) == 1:
        tb = _round_up(pl.cdiv(n_rows, 2), 8)
    return max(int(tb), 8)


def _critic_packed_kernel(x_ref, w1_ref, b1_ref, w2_ref, b2_ref, w3_ref, b3_ref, o_ref):
    # Layer 1 + tanh: MXU matmul against block-diagonal packed weights, f32
    # accumulation; activations stay f32 (v5e has no bf16 VPU/EUP).  The x
    # tile is cast to the weight dtype here (on VMEM data), never as a
    # separate wrapper HBM pass.
    h1 = jnp.dot(x_ref[...].astype(w1_ref.dtype), w1_ref[...],
                 preferred_element_type=jnp.float32)
    h1 = jnp.tanh(h1 + b1_ref[...])
    # Layer 2 + tanh: block-diagonal (128, 128) weight -> natural MXU shape.
    h2 = jnp.dot(h1.astype(w2_ref.dtype), w2_ref[...],
                 preferred_element_type=jnp.float32)
    h2 = jnp.tanh(h2 + b2_ref[...])
    # Layer 3: block-diagonal (128, p) weight -> one small MXU matmul whose
    # output is already lane-major (rows, p); scalar bias from SMEM; relu.
    h3 = jnp.dot(h2.astype(w3_ref.dtype), w3_ref[...],
                 preferred_element_type=jnp.float32) + b3_ref[0]
    o_ref[...] = jnp.maximum(h3, 0.0).astype(o_ref.dtype)


def _critic_kernel(x_ref, w1_ref, b1_ref, w2_ref, b2_ref, w3_ref, b3_ref, o_ref):
    h1 = jnp.dot(x_ref[...].astype(w1_ref.dtype), w1_ref[...],
                 preferred_element_type=jnp.float32)
    h1 = jnp.tanh(h1 + b1_ref[...])
    h2 = jnp.dot(h1.astype(w2_ref.dtype), w2_ref[...],
                 preferred_element_type=jnp.float32)
    h2 = jnp.tanh(h2 + b2_ref[...])
    # out_features == 1: VPU multiply + cross-lane reduce instead of an N=1
    # MXU matmul; keepdims keeps the natural sublane-major (rows, 1) layout so
    # the store needs no XLU relayout.
    h3 = jnp.sum(h2 * w3_ref[...].astype(jnp.float32), axis=-1, keepdims=True)
    o_ref[...] = jnp.maximum(h3 + b3_ref[0], 0.0).astype(o_ref.dtype)


def critic_forward(x, w1, b1, w2, b2, w3, b3, *, target_block_rows=8192):
    """relu(tanh(tanh(x @ w1 + b1) @ w2 + b2) @ w3 + b3), one fused kernel.

    x : (batch, obs_dim), streamed tile-by-tile in its own dtype (pass bf16 x
        to halve its HBM traffic); cast to the weight dtype only in-kernel.
    w1: (obs_dim, h)  b1: (1, h)   w2: (h, h)  b2: (1, h)
    w3: (h, 1)        b3: (1,)
    Returns (batch, 1) float32.
    """
    batch, obs_dim = x.shape
    h_dim = w1.shape[1]

    b1 = b1.astype(jnp.float32)
    b2 = b2.astype(jnp.float32)
    b3 = b3.astype(jnp.float32).reshape(1)

    cp = pltpu.CompilerParams(dimension_semantics=("parallel",),
                              vmem_limit_bytes=_VMEM_LIMIT)
    smem_spec = pl.BlockSpec(memory_space=pltpu.MemorySpace.SMEM)

    # Lane packing: with h_dim << 128 the hidden activations occupy only
    # h/128 of each vreg's lanes.  Pack p = 128 // h_dim batch rows per
    # activation row via block-diagonal weights (tiny, <= 64 KiB f32 for
    # h <= 64; cache them in the caller if desired).
    p = 128 // h_dim if (h_dim <= 64 and 128 % h_dim == 0) else 1

    if p >= 2 and batch % p == 0:
        eye = jnp.eye(p, dtype=w1.dtype)
        w1p = jnp.kron(eye, w1)                          # (p*obs_dim, 128)
        w2p = jnp.kron(eye.astype(w2.dtype), w2)         # (128, 128)
        w3p = jnp.kron(eye.astype(w3.dtype), w3)         # (128, p)
        b1p = jnp.tile(b1, (1, p))                       # (1, 128)
        b2p = jnp.tile(b2, (1, p))                       # (1, 128)
        xp = x.reshape(batch // p, p * obs_dim)          # free row-major reshape

        n_rows = batch // p
        in_dim, h_cols, out_cols = p * obs_dim, p * h_dim, p
        resident_bytes = sum(int(a.size) * a.dtype.itemsize
                             for a in (w1p, b1p, w2p, b2p, w3p))
        per_row_bytes = (2 * in_dim * x.dtype.itemsize
                         + 2 * h_cols * 4 + 2 * out_cols * 4)
        tb = _pick_block_rows(n_rows, per_row_bytes, resident_bytes,
                              max(target_block_rows // p, 128))
        grid = (int(pl.cdiv(n_rows, tb)),)   # partial tail block clipped by Pallas

        out = pl.pallas_call(
            _critic_packed_kernel,
            out_shape=jax.ShapeDtypeStruct((n_rows, p), jnp.float32),
            grid=grid,
            in_specs=[
                pl.BlockSpec((tb, in_dim), lambda i: (i, 0)),   # streamed x
                _resident(w1p), _resident(b1p),
                _resident(w2p), _resident(b2p),
                _resident(w3p),
                smem_spec,                                      # scalar b3
            ],
            out_specs=pl.BlockSpec((tb, p), lambda i: (i, 0)),
            compiler_params=cp,
        )(xp, w1p, b1p, w2p, b2p, w3p, b3)
        return out.reshape(batch, 1)

    # Fallback: h_dim does not pack into 128 lanes, or batch % p != 0.
    # TODO(synk): if the bundle dump ever shows vld/vst saturation at very
    # large tb/h_dim, sub-chunk the tile with an unrolled lax.fori_loop.
    w3row = w3.reshape(1, h_dim)
    resident_bytes = sum(int(a.size) * a.dtype.itemsize
                         for a in (w1, b1, w2, b2, w3row))
    per_row_bytes = 2 * obs_dim * x.dtype.itemsize + 2 * h_dim * 4 + 2 * 4
    tb = _pick_block_rows(batch, per_row_bytes, resident_bytes, target_block_rows)
    grid = (int(pl.cdiv(batch, tb)),)

    out = pl.pallas_call(
        _critic_kernel,
        out_shape=jax.ShapeDtypeStruct((batch, 1), jnp.float32),
        grid=grid,
        in_specs=[
            pl.BlockSpec((tb, obs_dim), lambda i: (i, 0)),
            _resident(w1), _resident(b1),
            _resident(w2), _resident(b2),
            _resident(w3row),
            smem_spec,
        ],
        out_specs=pl.BlockSpec((tb, 1), lambda i: (i, 0)),
        compiler_params=cp,
    )(x, w1, b1, w2, b2, w3row, b3)
    return out


def init_params(key, obs_dim, h_dim, param_dtype=jnp.float32):
    """PyTorch-style uniform(-1/sqrt(fan_in)) init.  Weights are stored for
    y = x @ W + b (transposed vs. torch's [out, in]); w3 is the (h, 1) column,
    b3 a length-1 vector.  Pass param_dtype=bf16 to pre-store bf16 weights
    (no per-call cast pass); biases stay f32."""
    ks = jax.random.split(key, 6)

    def lin(kw, kb, fan_in, fan_out):
        bound = 1.0 / (fan_in ** 0.5)
        w = jax.random.uniform(kw, (fan_in, fan_out), jnp.float32, -bound, bound)
        b = jax.random.uniform(kb, (1, fan_out), jnp.float32, -bound, bound)
        return w.astype(param_dtype), b

    w1, b1 = lin(ks[0], ks[1], obs_dim, h_dim)
    w2, b2 = lin(ks[2], ks[3], h_dim, h_dim)
    w3, b3 = lin(ks[4], ks[5], h_dim, 1)
    return w1, b1, w2, b2, w3, b3.reshape(1)


if __name__ == "__main__":
    key = jax.random.PRNGKey(0)
    k_p, k1, k2, k3, k4 = jax.random.split(key, 5)

    obs_dim, h_dim = 16, 32
    params = init_params(k_p, obs_dim, h_dim)

    def reference(xv, ps):
        w1, b1, w2, b2, w3, b3 = [a.astype(jnp.float32) for a in ps]
        h1 = jnp.tanh(xv.astype(jnp.float32) @ w1 + b1)
        h2 = jnp.tanh(h1 @ w2 + b2)
        return jnp.maximum(h2 @ w3 + b3, 0.0)

    # 1) Small batch, packed path (h=32 -> 4 rows per 128-lane activation row).
    x = jax.random.normal(k1, (8, obs_dim), jnp.float32)
    out = jax.block_until_ready(critic_forward(x, *params))
    assert out.shape == (8, 1)
    assert jnp.allclose(out, reference(x, params), atol=1e-4, rtol=1e-4)

    # 2) Larger, non-multiple-of-128 batch, still packed (300 % 4 == 0);
    #    exercises partial-block clipping with no wrapper-side padding.
    x2 = jax.random.normal(k2, (300, obs_dim), jnp.float32)
    out2 = jax.block_until_ready(critic_forward(x2, *params))
    assert out2.shape == (300, 1)
    assert jnp.allclose(out2, reference(x2, params), atol=1e-4, rtol=1e-4)

    # 3) Batch not divisible by the packing factor -> unpacked fallback path.
    x3 = jax.random.normal(k3, (10, obs_dim), jnp.float32)
    out3 = jax.block_until_ready(critic_forward(x3, *params))
    assert out3.shape == (10, 1)
    assert jnp.allclose(out3, reference(x3, params), atol=1e-4, rtol=1e-4)

    # 4) Pre-stored bf16 weights (halved weight footprint / MXU bf16), f32 x.
    params_bf16 = init_params(k_p, obs_dim, h_dim, param_dtype=jnp.bfloat16)
    x4 = jax.random.normal(k4, (256, obs_dim), jnp.float32)
    out4 = jax.block_until_ready(critic_forward(x4, *params_bf16))
    assert out4.shape == (256, 1)
    assert jnp.allclose(out4, reference(x4, params_bf16), atol=5e-2, rtol=5e-2)

    print("KERNEL_OK")
</pallas_src>

<mosaic_0001>
module attributes {stable_mosaic.version = 11 : i64} {
  func.func @_critic_packed_kernel(%arg0: i32, %arg1: memref<8x64xf32, #tpu.memory_space<vmem>>, %arg2: memref<64x128xf32, #tpu.memory_space<vmem>>, %arg3: memref<1x128xf32, #tpu.memory_space<vmem>>, %arg4: memref<128x128xf32, #tpu.memory_space<vmem>>, %arg5: memref<1x128xf32, #tpu.memory_space<vmem>>, %arg6: memref<128x4xf32, #tpu.memory_space<vmem>>, %arg7: memref<1xf32, #tpu.memory_space<smem>>, %arg8: memref<8x4xf32, #tpu.memory_space<vmem>>) attributes {dimension_semantics = [#tpu.dimension_semantics<parallel>], iteration_bounds = array<i64: 1>, scalar_prefetch = 0 : i64, scratch_operands = 0 : i64, tpu.core_type = #tpu.core_type<tc>, window_params = [{transform_indices = @transform_0, window_bounds = array<i64: 8, 64>}, {pipeline_mode = #tpu.pipeline_mode<synchronous>, transform_indices = @transform_1, window_bounds = array<i64: 64, 128>}, {pipeline_mode = #tpu.pipeline_mode<synchronous>, transform_indices = @transform_2, window_bounds = array<i64: 1, 128>}, {pipeline_mode = #tpu.pipeline_mode<synchronous>, transform_indices = @transform_3, window_bounds = array<i64: 128, 128>}, {pipeline_mode = #tpu.pipeline_mode<synchronous>, transform_indices = @transform_4, window_bounds = array<i64: 1, 128>}, {pipeline_mode = #tpu.pipeline_mode<synchronous>, transform_indices = @transform_5, window_bounds = array<i64: 128, 4>}, {transform_indices = @transform_6, window_bounds = array<i64: 1>}, {transform_indices = @transform_7, window_bounds = array<i64: 8, 4>}]} {
    %c0 = arith.constant 0 : index
    %c0_0 = arith.constant 0 : index
    %0 = vector.load %arg1[%c0, %c0_0] : memref<8x64xf32, #tpu.memory_space<vmem>>, vector<8x64xf32>
    %c0_1 = arith.constant 0 : index
    %c0_2 = arith.constant 0 : index
    %1 = vector.load %arg2[%c0_1, %c0_2] : memref<64x128xf32, #tpu.memory_space<vmem>>, vector<64x128xf32>
    %cst = arith.constant dense<0.000000e+00> : vector<8x128xf32>
    %2 = tpu.matmul %0, %1, %cst {dimension_numbers = #tpu.dot_dimension_numbers<[1], [0], [0], [1], [0, 0, 1, 1], [], []>} : vector<8x64xf32>, vector<64x128xf32>, vector<8x128xf32> -> vector<8x128xf32>
    %c0_3 = arith.constant 0 : index
    %c0_4 = arith.constant 0 : index
    %3 = vector.load %arg3[%c0_3, %c0_4] : memref<1x128xf32, #tpu.memory_space<vmem>>, vector<1x128xf32>
    %4 = vector.broadcast %3 : vector<1x128xf32> to vector<8x128xf32>
    %5 = arith.addf %2, %4 : vector<8x128xf32>
    %6 = math.tanh %5 : vector<8x128xf32>
    %c0_5 = arith.constant 0 : index
    %c0_6 = arith.constant 0 : index
    %7 = vector.load %arg4[%c0_5, %c0_6] : memref<128x128xf32, #tpu.memory_space<vmem>>, vector<128x128xf32>
    %cst_7 = arith.constant dense<0.000000e+00> : vector<8x128xf32>
    %8 = tpu.matmul %6, %7, %cst_7 {dimension_numbers = #tpu.dot_dimension_numbers<[1], [0], [0], [1], [0, 0, 1, 1], [], []>} : vector<8x128xf32>, vector<128x128xf32>, vector<8x128xf32> -> vector<8x128xf32>
    %c0_8 = arith.constant 0 : index
    %c0_9 = arith.constant 0 : index
    %9 = vector.load %arg5[%c0_8, %c0_9] : memref<1x128xf32, #tpu.memory_space<vmem>>, vector<1x128xf32>
    %10 = vector.broadcast %9 : vector<1x128xf32> to vector<8x128xf32>
    %11 = arith.addf %8, %10 : vector<8x128xf32>
    %12 = math.tanh %11 : vector<8x128xf32>
    %c0_10 = arith.constant 0 : index
    %c0_11 = arith.constant 0 : index
    %13 = vector.load %arg6[%c0_10, %c0_11] : memref<128x4xf32, #tpu.memory_space<vmem>>, vector<128x4xf32>
    %cst_12 = arith.constant dense<0.000000e+00> : vector<8x4xf32>
    %14 = tpu.matmul %12, %13, %cst_12 {dimension_numbers = #tpu.dot_dimension_numbers<[1], [0], [0], [1], [0, 0, 1, 1], [], []>} : vector<8x128xf32>, vector<128x4xf32>, vector<8x4xf32> -> vector<8x4xf32>
    %c0_13 = arith.constant 0 : index
    %15 = memref.load %arg7[%c0_13] : memref<1xf32, #tpu.memory_space<smem>>
    %16 = vector.broadcast %15 : f32 to vector<8x4xf32>
    %17 = arith.addf %14, %16 : vector<8x4xf32>
    %cst_14 = arith.constant 0.000000e+00 : f32
    %18 = vector.broadcast %cst_14 : f32 to vector<8x4xf32>
    %19 = arith.maximumf %17, %18 : vector<8x4xf32>
    %c0_15 = arith.constant 0 : index
    %c0_16 = arith.constant 0 : index
    %20 = vector.load %arg8[%c0_15, %c0_16] : memref<8x4xf32, #tpu.memory_space<vmem>>, vector<8x4xf32>
    tpu.vector_store %arg8[%c0_15, %c0_16], %19 {strides = array<i32>} : memref<8x4xf32, #tpu.memory_space<vmem>>, vector<8x4xf32>,
    return
  }
  func.func @transform_0(%arg0: i32) -> (i32, i32) {
    %c0_i32 = arith.constant 0 : i32
    %c0_i32_0 = arith.constant 0 : i32
    return %arg0, %c0_i32 : i32, i32
  }
  func.func @transform_1(%arg0: i32) -> (i32, i32) {
    %c0_i32 = arith.constant 0 : i32
    %c0_i32_0 = arith.constant 0 : i32
    %c0_i32_1 = arith.constant 0 : i32
    return %c0_i32, %c0_i32_0 : i32, i32
  }
  func.func @transform_2(%arg0: i32) -> (i32, i32) {
    %c0_i32 = arith.constant 0 : i32
    %c0_i32_0 = arith.constant 0 : i32
    %c0_i32_1 = arith.constant 0 : i32
    return %c0_i32, %c0_i32_0 : i32, i32
  }
  func.func @transform_3(%arg0: i32) -> (i32, i32) {
    %c0_i32 = arith.constant 0 : i32
    %c0_i32_0 = arith.constant 0 : i32
    %c0_i32_1 = arith.constant 0 : i32
    return %c0_i32, %c0_i32_0 : i32, i32
  }
  func.func @transform_4(%arg0: i32) -> (i32, i32) {
    %c0_i32 = arith.constant 0 : i32
    %c0_i32_0 = arith.constant 0 : i32
    %c0_i32_1 = arith.constant 0 : i32
    return %c0_i32, %c0_i32_0 : i32, i32
  }
  func.func @transform_5(%arg0: i32) -> (i32, i32) {
    %c0_i32 = arith.constant 0 : i32
    %c0_i32_0 = arith.constant 0 : i32
    %c0_i32_1 = arith.constant 0 : i32
    return %c0_i32, %c0_i32_0 : i32, i32
  }
  func.func @transform_6(%arg0: i32) -> i32 {
    %c0_i32 = arith.constant 0 : i32
    %c0_i32_0 = arith.constant 0 : i32
    return %c0_i32 : i32
  }
  func.func @transform_7(%arg0: i32) -> (i32, i32) {
    %c0_i32 = arith.constant 0 : i32
    %c0_i32_0 = arith.constant 0 : i32
    return %arg0, %c0_i32 : i32, i32
  }
}

</mosaic_0001>

<llo_original>
// kernel: tpu_custom_call.1
$region0: #{tpu_custom_call.1}
  #allocation0 [shape = 'u32[]', space=smem, size = 0x4, offset = 0x4, fixed_abs, tag = 'smem constant byte address 0x4 - core index']
  #allocation1 [shape = 'u32[144,128]{1,0:T(1,128)}', space=vmem, size = 0x12000, scoped, tag = 'internal scratch']
  #allocation2 [shape = 'f32[1]{0:T(128)S(6)}', space=smem, size = 0x200, scoped, tag = 'scoped memory for tpu_custom_call.1']
  %s0 = inlined_call_operand.vmem [shape: f32[2,64], index: 0, kind: input, shape index: {}]
  %s1 = inlined_call_operand.hbm [shape: f32[64,128], index: 1, kind: input, shape index: {}]
  %s2 = inlined_call_operand.vmem [shape: f32[1,128], index: 2, kind: input, shape index: {}]
  %s3 = inlined_call_operand.vmem [shape: f32[128,128], index: 3, kind: input, shape index: {}]
  %s4 = inlined_call_operand.vmem [shape: f32[1,128], index: 4, kind: input, shape index: {}]
  %s5 = inlined_call_operand.vmem [shape: f32[128,4], index: 5, kind: input, shape index: {}]
  %s6 = inlined_call_operand.<no memory space> [shape: f32[1], index: 6, kind: input, shape index: {}]
  %s7 = inlined_call_operand.hbm [shape: f32[2,4], index: 7, kind: output, shape index: {}]
  %s8 = sld [smem:[#allocation0]]
  $region42: #{tpu_custom_call.1} parent=0
    _
  %s10 = ssub.s32 1, %s8
  %s11 = scalar_select 0, %s10, %s8
  %12 = sst [smem:[#allocation2]] %s6
  $region1: #{tpu_custom_call.1} parent=0
    #allocation3 [shape = 'u8[32768]{0}', space=vmem, size = 0x8000, scoped, tag = 'input window, operand 1, single buffered']
    #allocation4 [shape = 's32[1]{0}', space=sflag, size = 0x4, scoped, tag = 'scoped memory for tpu_custom_call.1']
    #allocation5 [shape = 's32[1]{0}', space=sflag, size = 0x4, scoped, tag = 'scoped memory for tpu_custom_call.1']
    #allocation6 [shape = 'u8[4096]{0}', space=vmem, size = 0x1000, scoped, tag = 'output window, operand 0, single buffered']
    %13 = vsyncpa [#allocation4], 0
    %14 = vsyncpa [#allocation5], 0
    // Predicated region
    $region2: #{tpu_custom_call.1} parent=1 // pred_check
      _
    $region3: #{tpu_custom_call.1} parent=1 // pred_check_branch
      %16 = sbr.rel (0) target = $region5
    $region4: #{tpu_custom_call.1} parent=1 // pred_region
      _
    $region5: #{tpu_custom_call.1} parent=1 // pred_fallthru
      _
    // Predicated region
    $region6: #{tpu_custom_call.1} parent=1 // pred_check
      _
    $region7: #{tpu_custom_call.1} parent=1 // pred_check_branch
      %18 = sbr.rel (0) target = $region9
    $region8: #{tpu_custom_call.1} parent=1 // pred_region
      %s20 = ssub.s32 1024, 1024
      %21 = vsyncadd [#allocation4], %s20
      %s22 = sshll.u32 [#allocation3], 4
      %s23 = int_to_ptr.vmem [resolvable:$true] %s22
      %28 = dma.hbm_to_vmem [thread:$0]  %s1, 1024, %s23, [#allocation4], 128, 128, 8
    $region9: #{tpu_custom_call.1} parent=1 // pred_fallthru
      _
    // Predicated region
    $region10: #{tpu_custom_call.1} parent=1 // pred_check
      _
    $region11: #{tpu_custom_call.1} parent=1 // pred_check_branch
      %30 = sbr.rel (0) target = $region13
    $region12: #{tpu_custom_call.1} parent=1 // pred_region
      _
    $region13: #{tpu_custom_call.1} parent=1 // pred_fallthru
      _
    // Predicated region
    $region14: #{tpu_custom_call.1} parent=1 // pred_check
      _
    $region15: #{tpu_custom_call.1} parent=1 // pred_check_branch
      %32 = sbr.rel (0) target = $region17
    $region16: #{tpu_custom_call.1} parent=1 // pred_region
      _
    $region17: #{tpu_custom_call.1} parent=1 // pred_fallthru
      _
    // Predicated region
    $region18: #{tpu_custom_call.1} parent=1 // pred_check
      _
    $region19: #{tpu_custom_call.1} parent=1 // pred_check_branch
      %34 = sbr.rel (0) target = $region21
    $region20: #{tpu_custom_call.1} parent=1 // pred_region
      _
    $region21: #{tpu_custom_call.1} parent=1 // pred_fallthru
      _
    // Predicated region
    $region22: #{tpu_custom_call.1} parent=1 // pred_check
      _
    $region23: #{tpu_custom_call.1} parent=1 // pred_check_branch
      %36 = sbr.rel (0) target = $region25
    $region24: #{tpu_custom_call.1} parent=1 // pred_region
      _
    $region25: #{tpu_custom_call.1} parent=1 // pred_fallthru
      _
    // Predicated region
    $region26: #{tpu_custom_call.1} parent=1 // pred_check
      _
    $region27: #{tpu_custom_call.1} parent=1 // pred_check_branch
      %38 = sbr.rel (0) target = $region29
    $region28: #{tpu_custom_call.1} parent=1 // pred_region
      _
    $region29: #{tpu_custom_call.1} parent=1 // pred_fallthru
      _
    // Predicated region
    $region30: #{tpu_custom_call.1} parent=1 // pred_check
      _
    $region31: #{tpu_custom_call.1} parent=1 // pred_check_branch
      %40 = sbr.rel (0) target = $region33
    $region32: #{tpu_custom_call.1} parent=1 // pred_region
      %41 = dma.done [#allocation4], 1024
    $region33: #{tpu_custom_call.1} parent=1 // pred_fallthru
      _
    %v42 = vld [vmem:[%s0] sm:$0xff]
    %v43 = vld [vmem:[#allocation3] sm:$0xff]
    %v44 = vld [vmem:[#allocation3 + $0x8] sm:$0xff]
    %v45 = vld [vmem:[#allocation3 + $0x10] sm:$0xff]
    %v46 = vld [vmem:[#allocation3 + $0x18] sm:$0xff]
    %v47 = vld [vmem:[#allocation3 + $0x20] sm:$0xff]
    %v48 = vld [vmem:[#allocation3 + $0x28] sm:$0xff]
    %v49 = vld [vmem:[#allocation3 + $0x30] sm:$0xff]
    %v50 = vld [vmem:[#allocation3 + $0x38] sm:$0xff]
    %v51 = vld [vmem:[%s2] sm:$0x1]
    %v53 = vlaneseq
    %v54 = vshrl.u32 %v53, 7
    %v55 = vsub.s32 0, %v54
    %v56 = vrot.slane %v51, %v55
    %vm58 = vcmask 523264
    %v60 = vsel %vm58, %v42, 0
    %62 = vmatprep.subr.mxu0 0.0
    %63 = vmatpush1.msra.mxu0 0.0
    %64 = vmatprep.subr.mxu0 0.0
    %65 = vmatpush1.msra.mxu0 0.0
    %66 = vmatprep.subr.mxu0 0.0
    %67 = vmatpush1.msra.mxu0 0.0
    %68 = vmatprep.subr.mxu0 0.0
    %69 = vmatpush1.msra.mxu0 0.0
    %70 = vmatprep.subr.mxu0 0.0
    %71 = vmatpush1.msra.mxu0 0.0
    %72 = vmatprep.subr.mxu0 0.0
    %73 = vmatpush1.msra.mxu0 0.0
    %74 = vmatprep.subr.mxu0 0.0
    %75 = vmatpush1.msra.mxu0 0.0
    %76 = vmatprep.subr.mxu0 0.0
    %77 = vmatpush1.msra.mxu0 0.0
    %78 = vmatprep.subr.mxu0 0.0
    %79 = vmatpush1.msra.mxu0 %v50
    %80 = vmatprep.subr.mxu0 0.0
    %81 = vmatpush1.msra.mxu0 %v49
    %82 = vmatprep.subr.mxu0 0.0
    %83 = vmatpush1.msra.mxu0 %v48
    %84 = vmatprep.subr.mxu0 0.0
    %85 = vmatpush1.msra.mxu0 %v47
    %86 = vmatprep.subr.mxu0 0.0
    %87 = vmatpush1.msra.mxu0 %v46
    %88 = vmatprep.subr.mxu0 0.0
    %89 = vmatpush1.msra.mxu0 %v45
    %90 = vmatprep.subr.mxu0 0.0
    %91 = vmatpush1.msra.mxu0 %v44
    %92 = vmatprep.subr.mxu0 0.0
    %93 = vmatpush1.msra.mxu0 %v43
    %94 = vmatprep.subr.mxu0 0.0
    %95 = vmatpush2.msra.mxu0 0.0
    %96 = vmatprep.subr.mxu0 0.0
    %97 = vmatpush2.msra.mxu0 0.0
    %98 = vmatprep.subr.mxu0 0.0
    %99 = vmatpush2.msra.mxu0 0.0
    %100 = vmatprep.subr.mxu0 0.0
    %101 = vmatpush2.msra.mxu0 0.0
    %102 = vmatprep.subr.mxu0 0.0
    %103 = vmatpush2.msra.mxu0 0.0
    %104 = vmatprep.subr.mxu0 0.0
    %105 = vmatpush2.msra.mxu0 0.0
    %106 = vmatprep.subr.mxu0 0.0
    %107 = vmatpush2.msra.mxu0 0.0
    %108 = vmatprep.subr.mxu0 0.0
    %109 = vmatpush2.msra.mxu0 0.0
    %110 = vmatprep.subr.mxu0 0.0
    %111 = vmatpush2.msra.mxu0 0.0
    %112 = vmatprep.subr.mxu0 0.0
    %113 = vmatpush2.msra.mxu0 0.0
    %114 = vmatprep.subr.mxu0 0.0
    %115 = vmatpush2.msra.mxu0 0.0
    %116 = vmatprep.subr.mxu0 0.0
    %117 = vmatpush2.msra.mxu0 0.0
    %118 = vmatprep.subr.mxu0 0.0
    %119 = vmatpush2.msra.mxu0 0.0
    %120 = vmatprep.subr.mxu0 0.0
    %121 = vmatpush2.msra.mxu0 0.0
    %122 = vmatprep.subr.mxu0 0.0
    %123 = vmatpush2.msra.mxu0 0.0
    %124 = vmatprep.subr.mxu0 0.0
    %125 = vmatpush2.msra.mxu0 0.0
    %126 = vmatprep.mubr.f32.mxu0 0.0
    %127 = vmatmul.mubr.f32.gmra.mxu0 %v60
    %v128 = vpop.f32.mrf.mxu0
    %v129 = vadd.f32 %v56, %v128
    %v130 = vpop.f32.mrf.mxu0
    %131 = vdwg.mxu0
    %v132 = vtanh.pop %v129
    %v133 = vld [vmem:[%s3] sm:$0xff]
    %v134 = vld [vmem:[%s3 + $0x8] sm:$0xff]
    %v135 = vld [vmem:[%s3 + $0x10] sm:$0xff]
    %v136 = vld [vmem:[%s3 + $0x18] sm:$0xff]
    %v137 = vld [vmem:[%s3 + $0x20] sm:$0xff]
    %v138 = vld [vmem:[%s3 + $0x28] sm:$0xff]
    %v139 = vld [vmem:[%s3 + $0x30] sm:$0xff]
    %v140 = vld [vmem:[%s3 + $0x38] sm:$0xff]
    %v141 = vld [vmem:[%s3 + $0x40] sm:$0xff]
    %v142 = vld [vmem:[%s3 + $0x48] sm:$0xff]
    %v143 = vld [vmem:[%s3 + $0x50] sm:$0xff]
    %v144 = vld [vmem:[%s3 + $0x58] sm:$0xff]
    %v145 = vld [vmem:[%s3 + $0x60] sm:$0xff]
    %v146 = vld [vmem:[%s3 + $0x68] sm:$0xff]
    %v147 = vld [vmem:[%s3 + $0x70] sm:$0xff]
    %v148 = vld [vmem:[%s3 + $0x78] sm:$0xff]
    %v149 = vld [vmem:[%s4] sm:$0x1]
    %v151 = vlaneseq
    %v152 = vshrl.u32 %v151, 7
    %v153 = vsub.s32 0, %v152
    %v154 = vrot.slane %v149, %v153
    %156 = vmatprep.subr.mxu0 0.0
    %157 = vmatpush1.msra.mxu0 %v148
    %158 = vmatprep.subr.mxu0 0.0
    %159 = vmatpush1.msra.mxu0 %v147
    %160 = vmatprep.subr.mxu0 0.0
    %161 = vmatpush1.msra.mxu0 %v146
    %162 = vmatprep.subr.mxu0 0.0
    %163 = vmatpush1.msra.mxu0 %v145
    %164 = vmatprep.subr.mxu0 0.0
    %165 = vmatpush1.msra.mxu0 %v144
    %166 = vmatprep.subr.mxu0 0.0
    %167 = vmatpush1.msra.mxu0 %v143
    %168 = vmatprep.subr.mxu0 0.0
    %169 = vmatpush1.msra.mxu0 %v142
    %170 = vmatprep.subr.mxu0 0.0
    %171 = vmatpush1.msra.mxu0 %v141
    %172 = vmatprep.subr.mxu0 0.0
    %173 = vmatpush1.msra.mxu0 %v140
    %174 = vmatprep.subr.mxu0 0.0
    %175 = vmatpush1.msra.mxu0 %v139
    %176 = vmatprep.subr.mxu0 0.0
    %177 = vmatpush1.msra.mxu0 %v138
    %178 = vmatprep.subr.mxu0 0.0
    %179 = vmatpush1.msra.mxu0 %v137
    %180 = vmatprep.subr.mxu0 0.0
    %181 = vmatpush1.msra.mxu0 %v136
    %182 = vmatprep.subr.mxu0 0.0
    %183 = vmatpush1.msra.mxu0 %v135
    %184 = vmatprep.subr.mxu0 0.0
    %185 = vmatpush1.msra.mxu0 %v134
    %186 = vmatprep.subr.mxu0 0.0
    %187 = vmatpush1.msra.mxu0 %v133
    %188 = vmatprep.subr.mxu0 0.0
    %189 = vmatpush2.msra.mxu0 0.0
    %190 = vmatprep.subr.mxu0 0.0
    %191 = vmatpush2.msra.mxu0 0.0
    %192 = vmatprep.subr.mxu0 0.0
    %193 = vmatpush2.msra.mxu0 0.0
    %194 = vmatprep.subr.mxu0 0.0
    %195 = vmatpush2.msra.mxu0 0.0
    %196 = vmatprep.subr.mxu0 0.0
    %197 = vmatpush2.msra.mxu0 0.0
    %198 = vmatprep.subr.mxu0 0.0
    %199 = vmatpush2.msra.mxu0 0.0
    %200 = vmatprep.subr.mxu0 0.0
    %201 = vmatpush2.msra.mxu0 0.0
    %202 = vmatprep.subr.mxu0 0.0
    %203 = vmatpush2.msra.mxu0 0.0
    %204 = vmatprep.subr.mxu0 0.0
    %205 = vmatpush2.msra.mxu0 0.0
    %206 = vmatprep.subr.mxu0 0.0
    %207 = vmatpush2.msra.mxu0 0.0
    %208 = vmatprep.subr.mxu0 0.0
    %209 = vmatpush2.msra.mxu0 0.0
    %210 = vmatprep.subr.mxu0 0.0
    %211 = vmatpush2.msra.mxu0 0.0
    %212 = vmatprep.subr.mxu0 0.0
    %213 = vmatpush2.msra.mxu0 0.0
    %214 = vmatprep.subr.mxu0 0.0
    %215 = vmatpush2.msra.mxu0 0.0
    %216 = vmatprep.subr.mxu0 0.0
    %217 = vmatpush2.msra.mxu0 0.0
    %218 = vmatprep.subr.mxu0 0.0
    %219 = vmatpush2.msra.mxu0 0.0
    %220 = vmatprep.mubr.f32.mxu0 0.0
    %221 = vmatmul.mubr.f32.gmra.mxu0 %v132
    %v222 = vpop.f32.mrf.mxu0
    %v223 = vadd.f32 %v154, %v222
    %v224 = vpop.f32.mrf.mxu0
    %225 = vdwg.mxu0
    %v226 = vtanh.pop %v223
    %v227 = vld [vmem:[%s5] sm:$0xff]
    %v228 = vld [vmem:[%s5 + $0x8] sm:$0xff]
    %v229 = vld [vmem:[%s5 + $0x10] sm:$0xff]
    %v230 = vld [vmem:[%s5 + $0x18] sm:$0xff]
    %v231 = vld [vmem:[%s5 + $0x20] sm:$0xff]
    %v232 = vld [vmem:[%s5 + $0x28] sm:$0xff]
    %v233 = vld [vmem:[%s5 + $0x30] sm:$0xff]
    %v234 = vld [vmem:[%s5 + $0x38] sm:$0xff]
    %v235 = vld [vmem:[%s5 + $0x40] sm:$0xff]
    %v236 = vld [vmem:[%s5 + $0x48] sm:$0xff]
    %v237 = vld [vmem:[%s5 + $0x50] sm:$0xff]
    %v238 = vld [vmem:[%s5 + $0x58] sm:$0xff]
    %v239 = vld [vmem:[%s5 + $0x60] sm:$0xff]
    %v240 = vld [vmem:[%s5 + $0x68] sm:$0xff]
    %v241 = vld [vmem:[%s5 + $0x70] sm:$0xff]
    %v242 = vld [vmem:[%s5 + $0x78] sm:$0xff]
    %s243 = sld [smem:[#allocation2]]
    %v244 = vstv %s243
    %245 = vmatprep.subr.mxu0 0.0
    %246 = vmatpush1.msra.mxu0 %v242
    %247 = vmatprep.subr.mxu0 0.0
    %248 = vmatpush1.msra.mxu0 %v241
    %249 = vmatprep.subr.mxu0 0.0
    %250 = vmatpush1.msra.mxu0 %v240
    %251 = vmatprep.subr.mxu0 0.0
    %252 = vmatpush1.msra.mxu0 %v239
    %253 = vmatprep.subr.mxu0 0.0
    %254 = vmatpush1.msra.mxu0 %v238
    %255 = vmatprep.subr.mxu0 0.0
    %256 = vmatpush1.msra.mxu0 %v237
    %257 = vmatprep.subr.mxu0 0.0
    %258 = vmatpush1.msra.mxu0 %v236
    %259 = vmatprep.subr.mxu0 0.0
    %260 = vmatpush1.msra.mxu0 %v235
    %261 = vmatprep.subr.mxu0 0.0
    %262 = vmatpush1.msra.mxu0 %v234
    %263 = vmatprep.subr.mxu0 0.0
    %264 = vmatpush1.msra.mxu0 %v233
    %265 = vmatprep.subr.mxu0 0.0
    %266 = vmatpush1.msra.mxu0 %v232
    %267 = vmatprep.subr.mxu0 0.0
    %268 = vmatpush1.msra.mxu0 %v231
    %269 = vmatprep.subr.mxu0 0.0
    %270 = vmatpush1.msra.mxu0 %v230
    %271 = vmatprep.subr.mxu0 0.0
    %272 = vmatpush1.msra.mxu0 %v229
    %273 = vmatprep.subr.mxu0 0.0
    %274 = vmatpush1.msra.mxu0 %v228
    %275 = vmatprep.subr.mxu0 0.0
    %276 = vmatpush1.msra.mxu0 %v227
    %277 = vmatprep.subr.mxu0 0.0
    %278 = vmatpush2.msra.mxu0 0.0
    %279 = vmatprep.subr.mxu0 0.0
    %280 = vmatpush2.msra.mxu0 0.0
    %281 = vmatprep.subr.mxu0 0.0
    %282 = vmatpush2.msra.mxu0 0.0
    %283 = vmatprep.subr.mxu0 0.0
    %284 = vmatpush2.msra.mxu0 0.0
    %285 = vmatprep.subr.mxu0 0.0
    %286 = vmatpush2.msra.mxu0 0.0
    %287 = vmatprep.subr.mxu0 0.0
    %288 = vmatpush2.msra.mxu0 0.0
    %289 = vmatprep.subr.mxu0 0.0
    %290 = vmatpush2.msra.mxu0 0.0
    %291 = vmatprep.subr.mxu0 0.0
    %292 = vmatpush2.msra.mxu0 0.0
    %293 = vmatprep.subr.mxu0 0.0
    %294 = vmatpush2.msra.mxu0 0.0
    %295 = vmatprep.subr.mxu0 0.0
    %296 = vmatpush2.msra.mxu0 0.0
    %297 = vmatprep.subr.mxu0 0.0
    %298 = vmatpush2.msra.mxu0 0.0
    %299 = vmatprep.subr.mxu0 0.0
    %300 = vmatpush2.msra.mxu0 0.0
    %301 = vmatprep.subr.mxu0 0.0
    %302 = vmatpush2.msra.mxu0 0.0
    %303 = vmatprep.subr.mxu0 0.0
    %304 = vmatpush2.msra.mxu0 0.0
    %305 = vmatprep.subr.mxu0 0.0
    %306 = vmatpush2.msra.mxu0 0.0
    %307 = vmatprep.subr.mxu0 0.0
    %308 = vmatpush2.msra.mxu0 0.0
    %309 = vmatprep.mubr.f32.mxu0 0.0
    %310 = vmatmul.mubr.f32.gmra.mxu0 %v226
    %v311 = vpop.f32.mrf.mxu0
    %v312 = vadd.f32 %v244, %v311
    %v313 = vpop.f32.mrf.mxu0
    %314 = vdwg.mxu0
    %v315 = vmax.f32 %v312, 0.0
    %vm316 = vcmask 31744
    %317 = vst.msk [vmem:[#allocation6] sm:$0xff] %vm316, %v315
    // Predicated region
    $region34: #{tpu_custom_call.1} parent=1 // pred_check
      _
    $region35: #{tpu_custom_call.1} parent=1 // pred_check_branch
      %319 = sbr.rel (0) target = $region37
    $region36: #{tpu_custom_call.1} parent=1 // pred_region
      %s321 = ssub.s32 128, 32
      %322 = vsyncadd [#allocation5], %s321
      %s323 = sshll.u32 [#allocation6], 4
      %s324 = int_to_ptr.vmem [resolvable:$true] %s323
      %329 = dma.vmem_to_hbm [thread:$0]  %s324, 32, %s7, [#allocation5], 32, 32, 2
    $region37: #{tpu_custom_call.1} parent=1 // pred_fallthru
      _
    // Predicated region
    $region38: #{tpu_custom_call.1} parent=1 // pred_check
      _
    $region39: #{tpu_custom_call.1} parent=1 // pred_check_branch
      %331 = sbr.rel (0) target = $region41
    $region40: #{tpu_custom_call.1} parent=1 // pred_region
      %332 = dma.done [#allocation5], 128
    $region41: #{tpu_custom_call.1} parent=1 // pred_fallthru
      _
    %333 = vsyncpa [#allocation4], 1
    %334 = vsyncpa [#allocation5], 1

</llo_original>
